<compile_context>
chip_gen: v5e
topology: v5e:2x2
jax: 0.10.0
libtpu: 0.0.40
codegen_flags: <defaults>
</compile_context>

<pallas_src>
import functools

import jax
import jax.numpy as jnp
from jax.experimental import pallas as pl
from jax.experimental.pallas import tpu as pltpu


_LANES = 128                      # TPU vreg lane width
_SUB = 16                         # row-tile granularity (covers f32 (8) and bf16 (16) sublanes)
_TM_MAX = 2048                    # max packed rows per grid step
_TM_MIN = 512                     # soft floor so per-step overhead stays negligible
_VMEM_BUDGET = 44 * 1024 * 1024   # conservative working-set budget (fits v7x 64 MiB/TC)


def _round_up(n, m):
    return ((n + m - 1) // m) * m


def _cdiv(a, b):
    return -(-a // b)


def _connection_kernel(x_ref, w1_ref, b1_ref, w2_ref, b2_ref, o_ref):
    """y = relu(relu(x @ w1 + b1) @ w2 + b2) + x on one lane-dense row tile."""
    x = x_ref[...]
    h = jnp.dot(x.astype(w1_ref.dtype), w1_ref[...],
                preferred_element_type=jnp.float32)
    h = jnp.maximum(h + b1_ref[...].astype(jnp.float32), 0.0)
    h = jnp.dot(h.astype(w2_ref.dtype), w2_ref[...],
                preferred_element_type=jnp.float32)
    h = jnp.maximum(h + b2_ref[...].astype(jnp.float32), 0.0)
    o_ref[...] = (h + x.astype(jnp.float32)).astype(o_ref.dtype)


def _choose_tm(mp, cp, x_bytes, tile_budget_bytes):
    """Packed rows per grid step.

    Goals: >= ~4 grid steps (software pipelining + v7x megacore sharding), blocks big
    enough to amortize per-step overhead, total tile VMEM under the given budget.
    """
    if mp <= _SUB:
        return mp                                    # single full-array block
    # Per-row VMEM: double-buffered input + output tiles plus ~2 f32 temporaries
    # of the same width live inside the body.
    per_row = (2 * 2 * x_bytes + 2 * 4) * cp
    tm_budget = max((tile_budget_bytes // per_row) // _SUB * _SUB, _SUB)

    tm = max(min(_TM_MAX, _round_up(_cdiv(mp, 4), _SUB)), _TM_MIN)
    tm = min(tm, tm_budget)

    if tm >= mp:
        if mp < 4 * _SUB:
            return mp                                # too small to be worth splitting
        tm = _round_up(_cdiv(mp, 2), _SUB)           # guarantee >= 2 steps for v7x's 2 TCs
    # Rebalance within the same step count so the last (ragged) block is not a sliver.
    steps = _cdiv(mp, tm)
    return min(tm, _round_up(_cdiv(mp, steps), _SUB))


@functools.partial(jax.jit, static_argnames=("compute_dtype",))
def connection_forward(x, w1, b1, w2, b2, *, compute_dtype=None):
    """x: [..., C]; w1, w2: [C, C] (stored (in, out)); b1, b2: [1, C].

    compute_dtype: optional matmul-operand dtype (e.g. jnp.bfloat16 for the bf16 MXU
    path on v5e/v6e). Accumulation and the residual add stay in f32.
    """
    orig_shape = x.shape
    c = orig_shape[-1]
    assert w1.shape == (c, c) and w2.shape == (c, c), \
        "Connection residual requires in_ch == out_ch"

    if compute_dtype is not None:
        w1 = w1.astype(compute_dtype)
        w2 = w2.astype(compute_dtype)

    x2d = x.reshape(-1, c)
    m = x2d.shape[0]
    x_bytes = jnp.dtype(x.dtype).itemsize
    w_bytes = jnp.dtype(w1.dtype).itemsize

    # ---- lane-dense layout ---------------------------------------------------------
    if c < _LANES and _LANES % c == 0:
        pack, cp = _LANES // c, _LANES               # fold PACK tokens per 128-lane row
    else:
        pack, cp = 1, _round_up(c, _LANES)           # zero-pad features to a lane multiple

    if pack > 1:
        m_pad = _round_up(m, pack)
        if m_pad != m:                               # tail-only pad, skipped when possible
            x2d = jnp.pad(x2d, ((0, m_pad - m), (0, 0)))
        xp = x2d.reshape(m_pad // pack, cp)          # row i holds tokens i*pack .. i*pack+pack-1
        eye = jnp.eye(pack, dtype=w1.dtype)
        w1p, w2p = jnp.kron(eye, w1), jnp.kron(eye, w2)   # block-diagonal: exact in f32
        b1p, b2p = jnp.tile(b1, (1, pack)), jnp.tile(b2, (1, pack))
    else:
        m_pad = m
        if cp != c:                                  # C not a divisor / multiple of 128
            w1p = jnp.pad(w1, ((0, cp - c), (0, cp - c)))
            w2p = jnp.pad(w2, ((0, cp - c), (0, cp - c)))
            b1p = jnp.pad(b1, ((0, 0), (0, cp - c)))
            b2p = jnp.pad(b2, ((0, 0), (0, cp - c)))
            x2d = jnp.pad(x2d, ((0, 0), (0, cp - c)))
        else:
            w1p, w2p, b1p, b2p = w1, w2, b1, b2
        xp = x2d
    mp = m_pad // pack

    # ---- tiling / VMEM budget ------------------------------------------------------
    w_foot_single = (2 * cp * cp + 2 * cp) * w_bytes
    single_buffer_w = w_foot_single > (4 << 20)      # big weights: skip double-buffering
    w_foot = w_foot_single if single_buffer_w else 2 * w_foot_single
    tile_budget = max(_VMEM_BUDGET - w_foot, 2 << 20)
    tm = _choose_tm(mp, cp, x_bytes, tile_budget)
    grid = (_cdiv(mp, tm),)                          # ragged last block: OOB writes dropped

    vmem_need = w_foot + 2 * 2 * tm * cp * x_bytes + 2 * tm * cp * 4
    vmem_limit = int(min(max(vmem_need + vmem_need // 4, 32 << 20), 56 << 20))

    cost = pl.CostEstimate(
        flops=4 * mp * cp * cp,                      # two (mp,cp)x(cp,cp) matmuls actually run
        transcendentals=0,
        bytes_accessed=2 * mp * cp * x_bytes + (2 * cp * cp + 2 * cp) * w_bytes,
    )

    # Grid-invariant operands: constant index_map keeps them VMEM-resident; for large
    # weight footprints request a single buffer so big C still fits v7x's 64 MiB VMEM.
    w_kwargs = dict(pipeline_mode=pl.Buffered(1)) if single_buffer_w else {}

    out = pl.pallas_call(
        _connection_kernel,
        out_shape=jax.ShapeDtypeStruct((mp, cp), x.dtype),
        grid=grid,
        in_specs=[
            pl.BlockSpec((tm, cp), lambda i: (i, 0)),               # x tile (pipelined)
            pl.BlockSpec((cp, cp), lambda i: (0, 0), **w_kwargs),   # w1 (VMEM-resident)
            pl.BlockSpec((1, cp), lambda i: (0, 0), **w_kwargs),    # b1
            pl.BlockSpec((cp, cp), lambda i: (0, 0), **w_kwargs),   # w2
            pl.BlockSpec((1, cp), lambda i: (0, 0), **w_kwargs),    # b2
        ],
        out_specs=pl.BlockSpec((tm, cp), lambda i: (i, 0)),
        compiler_params=pltpu.CompilerParams(
            dimension_semantics=("parallel",),       # megacore shard on v7x
            vmem_limit_bytes=vmem_limit,
        ),
        cost_estimate=cost,
    )(xp, w1p, b1p, w2p, b2p)

    # ---- unpack (only copies when padding was actually applied) ---------------------
    if pack > 1:
        out = out.reshape(m_pad, c)
        if m_pad != m:
            out = out[:m]
    elif cp != c:
        out = out[:, :c]
    return out.reshape(orig_shape)


def init_params(key, in_ch, out_ch, dtype=jnp.float32):
    """Synthetic init mirroring nn.Linear shapes (stored transposed: [in, out])."""
    assert in_ch == out_ch, "Residual in Connection requires in_ch == out_ch"
    k1, k2, k3, k4 = jax.random.split(key, 4)
    bound1 = 1.0 / (in_ch ** 0.5)
    bound2 = 1.0 / (out_ch ** 0.5)
    w1 = jax.random.uniform(k1, (in_ch, out_ch), dtype, -bound1, bound1)
    b1 = jax.random.uniform(k2, (1, out_ch), dtype, -bound1, bound1)
    w2 = jax.random.uniform(k3, (out_ch, out_ch), dtype, -bound2, bound2)
    b2 = jax.random.uniform(k4, (1, out_ch), dtype, -bound2, bound2)
    return w1, b1, w2, b2


if __name__ == "__main__":
    key = jax.random.PRNGKey(0)
    kx, kp = jax.random.split(key)

    batch, seq, hidden = 2, 8, 32          # in_ch == out_ch == 32
    x = jax.random.normal(kx, (batch, seq, hidden), dtype=jnp.float32)
    w1, b1, w2, b2 = init_params(kp, hidden, hidden)

    y = connection_forward(x, w1, b1, w2, b2)
    y = jax.block_until_ready(y)

    # Pure-JAX reference check of the same math.
    h_ref = jnp.maximum(x @ w1 + b1[0], 0.0)
    h_ref = jnp.maximum(h_ref @ w2 + b2[0], 0.0)
    y_ref = h_ref + x
    assert y.shape == x.shape
    assert jnp.allclose(y, y_ref, atol=1e-5, rtol=1e-5), "mismatch vs reference"

    print("KERNEL_OK")
</pallas_src>

<mosaic_0001>
module attributes {stable_mosaic.version = 11 : i64} {
  func.func @_connection_kernel(%arg0: i32, %arg1: memref<4x128xf32, #tpu.memory_space<vmem>>, %arg2: memref<128x128xf32, #tpu.memory_space<vmem>>, %arg3: memref<1x128xf32, #tpu.memory_space<vmem>>, %arg4: memref<128x128xf32, #tpu.memory_space<vmem>>, %arg5: memref<1x128xf32, #tpu.memory_space<vmem>>, %arg6: memref<4x128xf32, #tpu.memory_space<vmem>>) attributes {dimension_semantics = [#tpu.dimension_semantics<parallel>], iteration_bounds = array<i64: 1>, scalar_prefetch = 0 : i64, scratch_operands = 0 : i64, tpu.core_type = #tpu.core_type<tc>, window_params = [{transform_indices = @transform_0, window_bounds = array<i64: 4, 128>}, {pipeline_mode = #tpu.pipeline_mode<synchronous>, transform_indices = @transform_1, window_bounds = array<i64: 128, 128>}, {pipeline_mode = #tpu.pipeline_mode<synchronous>, transform_indices = @transform_2, window_bounds = array<i64: 1, 128>}, {pipeline_mode = #tpu.pipeline_mode<synchronous>, transform_indices = @transform_3, window_bounds = array<i64: 128, 128>}, {pipeline_mode = #tpu.pipeline_mode<synchronous>, transform_indices = @transform_4, window_bounds = array<i64: 1, 128>}, {transform_indices = @transform_5, window_bounds = array<i64: 4, 128>}]} {
    %c0 = arith.constant 0 : index
    %c0_0 = arith.constant 0 : index
    %0 = vector.load %arg1[%c0, %c0_0] : memref<4x128xf32, #tpu.memory_space<vmem>>, vector<4x128xf32>
    %c0_1 = arith.constant 0 : index
    %c0_2 = arith.constant 0 : index
    %1 = vector.load %arg2[%c0_1, %c0_2] : memref<128x128xf32, #tpu.memory_space<vmem>>, vector<128x128xf32>
    %cst = arith.constant dense<0.000000e+00> : vector<4x128xf32>
    %2 = tpu.matmul %0, %1, %cst {dimension_numbers = #tpu.dot_dimension_numbers<[1], [0], [0], [1], [0, 0, 1, 1], [], []>} : vector<4x128xf32>, vector<128x128xf32>, vector<4x128xf32> -> vector<4x128xf32>
    %c0_3 = arith.constant 0 : index
    %c0_4 = arith.constant 0 : index
    %3 = vector.load %arg3[%c0_3, %c0_4] : memref<1x128xf32, #tpu.memory_space<vmem>>, vector<1x128xf32>
    %4 = vector.broadcast %3 : vector<1x128xf32> to vector<4x128xf32>
    %5 = arith.addf %2, %4 : vector<4x128xf32>
    %cst_5 = arith.constant 0.000000e+00 : f32
    %6 = vector.broadcast %cst_5 : f32 to vector<4x128xf32>
    %7 = arith.maximumf %5, %6 : vector<4x128xf32>
    %c0_6 = arith.constant 0 : index
    %c0_7 = arith.constant 0 : index
    %8 = vector.load %arg4[%c0_6, %c0_7] : memref<128x128xf32, #tpu.memory_space<vmem>>, vector<128x128xf32>
    %cst_8 = arith.constant dense<0.000000e+00> : vector<4x128xf32>
    %9 = tpu.matmul %7, %8, %cst_8 {dimension_numbers = #tpu.dot_dimension_numbers<[1], [0], [0], [1], [0, 0, 1, 1], [], []>} : vector<4x128xf32>, vector<128x128xf32>, vector<4x128xf32> -> vector<4x128xf32>
    %c0_9 = arith.constant 0 : index
    %c0_10 = arith.constant 0 : index
    %10 = vector.load %arg5[%c0_9, %c0_10] : memref<1x128xf32, #tpu.memory_space<vmem>>, vector<1x128xf32>
    %11 = vector.broadcast %10 : vector<1x128xf32> to vector<4x128xf32>
    %12 = arith.addf %9, %11 : vector<4x128xf32>
    %cst_11 = arith.constant 0.000000e+00 : f32
    %13 = vector.broadcast %cst_11 : f32 to vector<4x128xf32>
    %14 = arith.maximumf %12, %13 : vector<4x128xf32>
    %15 = arith.addf %14, %0 : vector<4x128xf32>
    %c0_12 = arith.constant 0 : index
    %c0_13 = arith.constant 0 : index
    %16 = vector.load %arg6[%c0_12, %c0_13] : memref<4x128xf32, #tpu.memory_space<vmem>>, vector<4x128xf32>
    tpu.vector_store %arg6[%c0_12, %c0_13], %15 {strides = array<i32>} : memref<4x128xf32, #tpu.memory_space<vmem>>, vector<4x128xf32>,
    return
  }
  func.func @transform_0(%arg0: i32) -> (i32, i32) {
    %c0_i32 = arith.constant 0 : i32
    %c0_i32_0 = arith.constant 0 : i32
    return %arg0, %c0_i32 : i32, i32
  }
  func.func @transform_1(%arg0: i32) -> (i32, i32) {
    %c0_i32 = arith.constant 0 : i32
    %c0_i32_0 = arith.constant 0 : i32
    %c0_i32_1 = arith.constant 0 : i32
    return %c0_i32, %c0_i32_0 : i32, i32
  }
  func.func @transform_2(%arg0: i32) -> (i32, i32) {
    %c0_i32 = arith.constant 0 : i32
    %c0_i32_0 = arith.constant 0 : i32
    %c0_i32_1 = arith.constant 0 : i32
    return %c0_i32, %c0_i32_0 : i32, i32
  }
  func.func @transform_3(%arg0: i32) -> (i32, i32) {
    %c0_i32 = arith.constant 0 : i32
    %c0_i32_0 = arith.constant 0 : i32
    %c0_i32_1 = arith.constant 0 : i32
    return %c0_i32, %c0_i32_0 : i32, i32
  }
  func.func @transform_4(%arg0: i32) -> (i32, i32) {
    %c0_i32 = arith.constant 0 : i32
    %c0_i32_0 = arith.constant 0 : i32
    %c0_i32_1 = arith.constant 0 : i32
    return %c0_i32, %c0_i32_0 : i32, i32
  }
  func.func @transform_5(%arg0: i32) -> (i32, i32) {
    %c0_i32 = arith.constant 0 : i32
    %c0_i32_0 = arith.constant 0 : i32
    return %arg0, %c0_i32 : i32, i32
  }
}

</mosaic_0001>

<llo_original>
// kernel: connection_forward.1
$region0: #{connection_forward.1}
  #allocation0 [shape = 'u32[]', space=smem, size = 0x4, offset = 0x4, fixed_abs, tag = 'smem constant byte address 0x4 - core index']
  #allocation1 [shape = 'u32[72,128]{1,0:T(1,128)}', space=vmem, size = 0x9000, scoped, tag = 'internal scratch']
  %s0 = inlined_call_operand.vmem [shape: f32[4,128], index: 0, kind: input, shape index: {}]
  %s1 = inlined_call_operand.vmem [shape: f32[128,128], index: 1, kind: input, shape index: {}]
  %s2 = inlined_call_operand.vmem [shape: f32[1,128], index: 2, kind: input, shape index: {}]
  %s3 = inlined_call_operand.vmem [shape: f32[128,128], index: 3, kind: input, shape index: {}]
  %s4 = inlined_call_operand.vmem [shape: f32[1,128], index: 4, kind: input, shape index: {}]
  %s5 = inlined_call_operand.vmem [shape: f32[4,128], index: 5, kind: output, shape index: {}]
  %s6 = sld [smem:[#allocation0]]
  $region30: #{connection_forward.1} parent=0
    _
  %s8 = ssub.s32 1, %s6
  %s9 = scalar_select 0, %s8, %s6
  // Predicated region
  $region2: #{connection_forward.1} parent=0 // pred_check
    _
  $region3: #{connection_forward.1} parent=0 // pred_check_branch
    %11 = sbr.rel (0) target = $region5
  $region4: #{connection_forward.1} parent=0 // pred_region
    _
  $region5: #{connection_forward.1} parent=0 // pred_fallthru
    _
  // Predicated region
  $region6: #{connection_forward.1} parent=0 // pred_check
    _
  $region7: #{connection_forward.1} parent=0 // pred_check_branch
    %13 = sbr.rel (0) target = $region9
  $region8: #{connection_forward.1} parent=0 // pred_region
    _
  $region9: #{connection_forward.1} parent=0 // pred_fallthru
    _
  // Predicated region
  $region10: #{connection_forward.1} parent=0 // pred_check
    _
  $region11: #{connection_forward.1} parent=0 // pred_check_branch
    %15 = sbr.rel (0) target = $region13
  $region12: #{connection_forward.1} parent=0 // pred_region
    _
  $region13: #{connection_forward.1} parent=0 // pred_fallthru
    _
  // Predicated region
  $region14: #{connection_forward.1} parent=0 // pred_check
    _
  $region15: #{connection_forward.1} parent=0 // pred_check_branch
    %17 = sbr.rel (0) target = $region17
  $region16: #{connection_forward.1} parent=0 // pred_region
    _
  $region17: #{connection_forward.1} parent=0 // pred_fallthru
    _
  // Predicated region
  $region18: #{connection_forward.1} parent=0 // pred_check
    _
  $region19: #{connection_forward.1} parent=0 // pred_check_branch
    %19 = sbr.rel (0) target = $region21
  $region20: #{connection_forward.1} parent=0 // pred_region
    _
  $region21: #{connection_forward.1} parent=0 // pred_fallthru
    _
  %v20 = vld [vmem:[%s0] sm:$0xf]
  %v21 = vld [vmem:[%s1] sm:$0xff]
  %v22 = vld [vmem:[%s1 + $0x8] sm:$0xff]
  %v23 = vld [vmem:[%s1 + $0x10] sm:$0xff]
  %v24 = vld [vmem:[%s1 + $0x18] sm:$0xff]
  %v25 = vld [vmem:[%s1 + $0x20] sm:$0xff]
  %v26 = vld [vmem:[%s1 + $0x28] sm:$0xff]
  %v27 = vld [vmem:[%s1 + $0x30] sm:$0xff]
  %v28 = vld [vmem:[%s1 + $0x38] sm:$0xff]
  %v29 = vld [vmem:[%s1 + $0x40] sm:$0xff]
  %v30 = vld [vmem:[%s1 + $0x48] sm:$0xff]
  %v31 = vld [vmem:[%s1 + $0x50] sm:$0xff]
  %v32 = vld [vmem:[%s1 + $0x58] sm:$0xff]
  %v33 = vld [vmem:[%s1 + $0x60] sm:$0xff]
  %v34 = vld [vmem:[%s1 + $0x68] sm:$0xff]
  %v35 = vld [vmem:[%s1 + $0x70] sm:$0xff]
  %v36 = vld [vmem:[%s1 + $0x78] sm:$0xff]
  %v37 = vld [vmem:[%s2] sm:$0x1]
  %v39 = vperm.slane %v37, 0
  %41 = vmatpush.msra.mxu0 %v36
  %42 = vmatpush.msra.mxu0 %v35
  %43 = vmatpush.msra.mxu0 %v34
  %44 = vmatpush.msra.mxu0 %v33
  %45 = vmatpush.msra.mxu0 %v32
  %46 = vmatpush.msra.mxu0 %v31
  %47 = vmatpush.msra.mxu0 %v30
  %48 = vmatpush.msra.mxu0 %v29
  %49 = vmatpush.msra.mxu0 %v28
  %50 = vmatpush.msra.mxu0 %v27
  %51 = vmatpush.msra.mxu0 %v26
  %52 = vmatpush.msra.mxu0 %v25
  %53 = vmatpush.msra.mxu0 %v24
  %54 = vmatpush.msra.mxu0 %v23
  %55 = vmatpush.msra.mxu0 %v22
  %56 = vmatpush.msra.mxu0 %v21
  %57 = vmatmul.f32.gmra.mxu0 %v20
  %v58 = vpop.f32.mrf.mxu0
  %v59 = vadd.f32 %v39, %v58
  %60 = vdwg.mxu0
  %v61 = vmax.f32 %v59, 0.0
  %v62 = vld [vmem:[%s3] sm:$0xff]
  %v63 = vld [vmem:[%s3 + $0x8] sm:$0xff]
  %v64 = vld [vmem:[%s3 + $0x10] sm:$0xff]
  %v65 = vld [vmem:[%s3 + $0x18] sm:$0xff]
  %v66 = vld [vmem:[%s3 + $0x20] sm:$0xff]
  %v67 = vld [vmem:[%s3 + $0x28] sm:$0xff]
  %v68 = vld [vmem:[%s3 + $0x30] sm:$0xff]
  %v69 = vld [vmem:[%s3 + $0x38] sm:$0xff]
  %v70 = vld [vmem:[%s3 + $0x40] sm:$0xff]
  %v71 = vld [vmem:[%s3 + $0x48] sm:$0xff]
  %v72 = vld [vmem:[%s3 + $0x50] sm:$0xff]
  %v73 = vld [vmem:[%s3 + $0x58] sm:$0xff]
  %v74 = vld [vmem:[%s3 + $0x60] sm:$0xff]
  %v75 = vld [vmem:[%s3 + $0x68] sm:$0xff]
  %v76 = vld [vmem:[%s3 + $0x70] sm:$0xff]
  %v77 = vld [vmem:[%s3 + $0x78] sm:$0xff]
  %v78 = vld [vmem:[%s4] sm:$0x1]
  %v80 = vperm.slane %v78, 0
  %82 = vmatpush.msra.mxu0 %v77
  %83 = vmatpush.msra.mxu0 %v76
  %84 = vmatpush.msra.mxu0 %v75
  %85 = vmatpush.msra.mxu0 %v74
  %86 = vmatpush.msra.mxu0 %v73
  %87 = vmatpush.msra.mxu0 %v72
  %88 = vmatpush.msra.mxu0 %v71
  %89 = vmatpush.msra.mxu0 %v70
  %90 = vmatpush.msra.mxu0 %v69
  %91 = vmatpush.msra.mxu0 %v68
  %92 = vmatpush.msra.mxu0 %v67
  %93 = vmatpush.msra.mxu0 %v66
  %94 = vmatpush.msra.mxu0 %v65
  %95 = vmatpush.msra.mxu0 %v64
  %96 = vmatpush.msra.mxu0 %v63
  %97 = vmatpush.msra.mxu0 %v62
  %98 = vmatmul.f32.gmra.mxu0 %v61
  %v99 = vpop.f32.mrf.mxu0
  %v100 = vadd.f32 %v80, %v99
  %101 = vdwg.mxu0
  %v102 = vmax.f32 %v100, 0.0
  %v103 = vadd.f32 %v102, %v20
  %104 = vst [vmem:[%s5] sm:$0xf] %v103
  // Predicated region
  $region22: #{connection_forward.1} parent=0 // pred_check
    _
  $region23: #{connection_forward.1} parent=0 // pred_check_branch
    %106 = sbr.rel (0) target = $region25
  $region24: #{connection_forward.1} parent=0 // pred_region
    _
  $region25: #{connection_forward.1} parent=0 // pred_fallthru
    _
  // Predicated region
  $region26: #{connection_forward.1} parent=0 // pred_check
    _
  $region27: #{connection_forward.1} parent=0 // pred_check_branch
    %108 = sbr.rel (0) target = $region29
  $region28: #{connection_forward.1} parent=0 // pred_region
    _
  $region29: #{connection_forward.1} parent=0 // pred_fallthru
    _

</llo_original>
